<compile_context>
chip_gen: v7x
topology: tpu7x:2x2x1
jax: 0.10.0
libtpu: 0.0.40
codegen_flags: <defaults>
</compile_context>

<pallas_src>
import functools

import jax
import jax.numpy as jnp
from jax.experimental import pallas as pl
from jax.experimental.pallas import tpu as pltpu

LANES = 128
MAX_TILE_P = 8192   # lanes per grid step; pred block = C * TILE_P * 4 bytes


def _dice_loss_kernel(pred_ref, label_ref, out_ref,
                      inter_acc, psum_acc, tsum_acc,
                      *, n_classes, n_samples, hw, tile_p, eps, k):
    n = pl.program_id(0)        # sample index
    p = pl.program_id(1)        # pixel-tile index (reduction axis, innermost)
    last_p = pl.num_programs(1) - 1
    last_n = pl.num_programs(0) - 1

    @pl.when((n == 0) & (p == 0))
    def _():
        out_ref[0] = 0.0

    @pl.when(p == 0)
    def _():
        inter_acc[...] = jnp.zeros_like(inter_acc)
        psum_acc[...] = jnp.zeros_like(psum_acc)
        tsum_acc[...] = jnp.zeros_like(tsum_acc)

    x = pred_ref[0].astype(jnp.float32)      # (C, TILE_P)
    lab = label_ref[0]                       # (1, TILE_P) int32

    # Validity mask for the zero-padded pixel tail (no extra HBM stream).
    pix = p * tile_p + jax.lax.broadcasted_iota(jnp.int32, (1, tile_p), 1)
    valid = (pix < hw).astype(jnp.float32)   # (1, TILE_P)

    # Numerically stable softmax over the channel (sublane) axis.
    m = jnp.max(x, axis=0, keepdims=True)
    e = jnp.exp(x - m)
    probs = e / jnp.sum(e, axis=0, keepdims=True)      # (C, TILE_P)

    # one_hot(label), restricted to valid pixels.
    cls = jax.lax.broadcasted_iota(jnp.int32, (n_classes, tile_p), 0)
    onehot = jnp.where(cls == lab, 1.0, 0.0) * valid   # (C, TILE_P)

    # Vector partial sums; the scalar reduce is deferred to the epilogue.
    inter_acc[...] += jnp.sum(probs * onehot, axis=0, keepdims=True)
    psum_acc[...] += valid * jnp.sum(probs, axis=0, keepdims=True)
    tsum_acc[...] += valid                  # sum over C of onehot == valid mask

    @pl.when(p == last_p)
    def _():
        inter = jnp.sum(inter_acc[...])
        union = jnp.sum(psum_acc[...]) + jnp.sum(tsum_acc[...]) + eps
        gd = (2.0 * inter + eps) / union
        loss_n = 1.0 - gd / (1.0 + k * (1.0 - gd))
        out_ref[0] += loss_n

        @pl.when(n == last_n)
        def _():
            out_ref[0] = out_ref[0] / n_samples


def dice_loss_pallas(pred, label, *, k=0, eps=1e-4):
    """pred: (N, C, H, W) logits; label: (N, H, W) or (N, 1, H, W) int class ids.

    Matches DiceLoss(from_logits=False, use_weights=False, k, eps).forward for
    the multi-class (C != 1) branch. Returns a scalar f32.
    """
    N, C, H, W = pred.shape
    if C == 1:
        # TODO(synk): single-channel (C == 1) sigmoid branch of dice_loss not implemented.
        raise NotImplementedError("C == 1 (sigmoid) branch not implemented")
    hw = H * W

    label = label.reshape(N, hw).astype(jnp.int32)
    pred = pred.reshape(N, C, hw)   # keep native dtype; cast to f32 inside the kernel

    # Pick a large lane-dense pixel tile; pad the pixel axis to a multiple of it.
    p_pad = ((hw + LANES - 1) // LANES) * LANES
    if p_pad <= MAX_TILE_P:
        tile_p = p_pad
    else:
        tile_p = MAX_TILE_P
        p_pad = ((hw + tile_p - 1) // tile_p) * tile_p
    pad = p_pad - hw
    if pad:
        pred = jnp.pad(pred, ((0, 0), (0, 0), (0, pad)))
        label = jnp.pad(label, ((0, 0), (0, pad)))
    label = label.reshape(N, 1, p_pad)

    grid_p = p_pad // tile_p
    kernel = functools.partial(
        _dice_loss_kernel,
        n_classes=C, n_samples=float(N), hw=hw, tile_p=tile_p,
        eps=float(eps), k=float(k))

    out = pl.pallas_call(
        kernel,
        out_shape=jax.ShapeDtypeStruct((1,), jnp.float32),
        grid_spec=pltpu.PrefetchScalarGridSpec(
            num_scalar_prefetch=0,
            grid=(N, grid_p),
            in_specs=[
                pl.BlockSpec((1, C, tile_p), lambda n, p: (n, 0, p)),
                pl.BlockSpec((1, 1, tile_p), lambda n, p: (n, 0, p)),
            ],
            out_specs=pl.BlockSpec(memory_space=pltpu.MemorySpace.SMEM),
            scratch_shapes=[
                pltpu.VMEM((1, tile_p), jnp.float32),   # intersection partials
                pltpu.VMEM((1, tile_p), jnp.float32),   # sum(probs) partials
                pltpu.VMEM((1, tile_p), jnp.float32),   # sum(onehot) partials
            ],
        ),
        compiler_params=pltpu.CompilerParams(
            dimension_semantics=("arbitrary", "arbitrary")),
    )(pred, label)
    return out[0]


def dice_loss_ref(pred, label, *, k=0, eps=1e-4):
    """Pure-JAX reference of the PyTorch dice_loss (multi-class branch)."""
    N, C, H, W = pred.shape
    probs = jax.nn.softmax(pred.astype(jnp.float32), axis=1)
    onehot = jax.nn.one_hot(label.reshape(N, H, W), C, dtype=jnp.float32)
    onehot = jnp.transpose(onehot, (0, 3, 1, 2))
    inter = jnp.sum(probs * onehot, axis=(1, 2, 3))
    union = jnp.sum(probs, axis=(1, 2, 3)) + jnp.sum(onehot, axis=(1, 2, 3)) + eps
    gd = (2.0 * inter + eps) / union
    loss = 1.0 - gd / (1.0 + k * (1.0 - gd))
    return jnp.mean(loss)


if __name__ == "__main__":
    key = jax.random.PRNGKey(0)
    k_pred, k_label = jax.random.split(key)

    N, C, H, W = 2, 4, 16, 16
    pred = jax.random.normal(k_pred, (N, C, H, W), dtype=jnp.float32)
    label = jax.random.randint(k_label, (N, H, W), 0, C, dtype=jnp.int32)

    loss = dice_loss_pallas(pred, label)
    loss = jax.block_until_ready(loss)

    ref = dice_loss_ref(pred, label)
    assert jnp.allclose(loss, ref, atol=1e-5, rtol=1e-5), (loss, ref)

    print("KERNEL_OK")
</pallas_src>

<mosaic_0001>
module attributes {stable_mosaic.version = 11 : i64} {
  func.func @_dice_loss_kernel(%arg0: i32, %arg1: i32, %arg2: memref<1x4x256xf32, #tpu.memory_space<vmem>>, %arg3: memref<1x1x256xi32, #tpu.memory_space<vmem>>, %arg4: memref<1xf32, #tpu.memory_space<smem>>, %arg5: memref<1x256xf32, #tpu.memory_space<vmem>>, %arg6: memref<1x256xf32, #tpu.memory_space<vmem>>, %arg7: memref<1x256xf32, #tpu.memory_space<vmem>>) attributes {dimension_semantics = [#tpu.dimension_semantics<arbitrary>, #tpu.dimension_semantics<arbitrary>], iteration_bounds = array<i64: 2, 1>, scalar_prefetch = 0 : i64, scratch_operands = 3 : i64, tpu.core_type = #tpu.core_type<tc>, window_params = [{transform_indices = @transform_0, window_bounds = array<i64: 1, 4, 256>}, {transform_indices = @transform_1, window_bounds = array<i64: 1, 1, 256>}, {transform_indices = @transform_2, window_bounds = array<i64: 1>}]} {
    %c0_i32 = arith.constant 0 : i32
    %0 = arith.cmpi eq, %arg0, %c0_i32 : i32
    %c0_i32_0 = arith.constant 0 : i32
    %1 = arith.cmpi eq, %arg1, %c0_i32_0 : i32
    %2 = arith.andi %0, %1 : i1
    %3 = arith.extui %2 : i1 to i32
    %c0_i32_1 = arith.constant 0 : i32
    %4 = arith.cmpi ne, %3, %c0_i32_1 : i32
    scf.if %4 {
      %cst_29 = arith.constant 0.000000e+00 : f32
      %c0_30 = arith.constant 0 : index
      %55 = memref.load %arg4[%c0_30] : memref<1xf32, #tpu.memory_space<smem>>
      memref.store %cst_29, %arg4[%c0_30] : memref<1xf32, #tpu.memory_space<smem>>
    } else {
    }
    %c0_i32_2 = arith.constant 0 : i32
    %5 = arith.cmpi eq, %arg1, %c0_i32_2 : i32
    %6 = arith.extui %5 : i1 to i32
    %c0_i32_3 = arith.constant 0 : i32
    %7 = arith.cmpi ne, %6, %c0_i32_3 : i32
    scf.if %7 {
      %cst_29 = arith.constant 0.000000e+00 : f32
      %55 = vector.broadcast %cst_29 : f32 to vector<1x256xf32>
      %c0_30 = arith.constant 0 : index
      %c0_31 = arith.constant 0 : index
      %56 = vector.load %arg5[%c0_30, %c0_31] : memref<1x256xf32, #tpu.memory_space<vmem>>, vector<1x256xf32>
      tpu.vector_store %arg5[%c0_30, %c0_31], %55 {strides = array<i32>} : memref<1x256xf32, #tpu.memory_space<vmem>>, vector<1x256xf32>,
      %cst_32 = arith.constant 0.000000e+00 : f32
      %57 = vector.broadcast %cst_32 : f32 to vector<1x256xf32>
      %c0_33 = arith.constant 0 : index
      %c0_34 = arith.constant 0 : index
      %58 = vector.load %arg6[%c0_33, %c0_34] : memref<1x256xf32, #tpu.memory_space<vmem>>, vector<1x256xf32>
      tpu.vector_store %arg6[%c0_33, %c0_34], %57 {strides = array<i32>} : memref<1x256xf32, #tpu.memory_space<vmem>>, vector<1x256xf32>,
      %cst_35 = arith.constant 0.000000e+00 : f32
      %59 = vector.broadcast %cst_35 : f32 to vector<1x256xf32>
      %c0_36 = arith.constant 0 : index
      %c0_37 = arith.constant 0 : index
      %60 = vector.load %arg7[%c0_36, %c0_37] : memref<1x256xf32, #tpu.memory_space<vmem>>, vector<1x256xf32>
      tpu.vector_store %arg7[%c0_36, %c0_37], %59 {strides = array<i32>} : memref<1x256xf32, #tpu.memory_space<vmem>>, vector<1x256xf32>,
    } else {
    }
    %c0 = arith.constant 0 : index
    %c0_4 = arith.constant 0 : index
    %c0_5 = arith.constant 0 : index
    %8 = vector.load %arg2[%c0, %c0_4, %c0_5] : memref<1x4x256xf32, #tpu.memory_space<vmem>>, vector<1x4x256xf32>
    %9 = vector.shape_cast %8 : vector<1x4x256xf32> to vector<4x256xf32>
    %c0_6 = arith.constant 0 : index
    %c0_7 = arith.constant 0 : index
    %c0_8 = arith.constant 0 : index
    %10 = vector.load %arg3[%c0_6, %c0_7, %c0_8] : memref<1x1x256xi32, #tpu.memory_space<vmem>>, vector<1x1x256xi32>
    %11 = vector.shape_cast %10 : vector<1x1x256xi32> to vector<1x256xi32>
    %c256_i32 = arith.constant 256 : i32
    %12 = arith.muli %arg1, %c256_i32 : i32
    %13 = tpu.iota {dimensions = array<i32: 1>} : vector<1x256xi32>
    %14 = vector.broadcast %12 : i32 to vector<1x256xi32>
    %15 = arith.addi %14, %13 : vector<1x256xi32>
    %c256_i32_9 = arith.constant 256 : i32
    %16 = vector.broadcast %c256_i32_9 : i32 to vector<1x256xi32>
    %17 = arith.cmpi slt, %15, %16 : vector<1x256xi32>
    %18 = arith.extui %17 : vector<1x256xi1> to vector<1x256xi32>
    %19 = arith.sitofp %18 : vector<1x256xi32> to vector<1x256xf32>
    %cst = arith.constant dense<0xFF800000> : vector<256xf32>
    %20 = vector.multi_reduction <maximumf>, %9, %cst [0] : vector<4x256xf32> to vector<256xf32>
    %21 = vector.shape_cast %20 : vector<256xf32> to vector<1x256xf32>
    %22 = vector.broadcast %21 : vector<1x256xf32> to vector<4x256xf32>
    %23 = arith.subf %9, %22 : vector<4x256xf32>
    %24 = math.exp %23 : vector<4x256xf32>
    %cst_10 = arith.constant dense<0.000000e+00> : vector<256xf32>
    %25 = vector.multi_reduction <add>, %24, %cst_10 [0] : vector<4x256xf32> to vector<256xf32>
    %26 = vector.shape_cast %25 : vector<256xf32> to vector<1x256xf32>
    %27 = vector.broadcast %26 : vector<1x256xf32> to vector<4x256xf32>
    %28 = arith.divf %24, %27 : vector<4x256xf32>
    %29 = tpu.iota {dimensions = array<i32: 0>} : vector<4x256xi32>
    %30 = vector.broadcast %11 : vector<1x256xi32> to vector<4x256xi32>
    %31 = arith.cmpi eq, %29, %30 : vector<4x256xi32>
    %cst_11 = arith.constant 1.000000e+00 : f32
    %cst_12 = arith.constant 0.000000e+00 : f32
    %32 = vector.broadcast %cst_11 : f32 to vector<4x256xf32>
    %33 = vector.broadcast %cst_12 : f32 to vector<4x256xf32>
    %34 = arith.select %31, %32, %33 : vector<4x256xi1>, vector<4x256xf32>
    %35 = vector.broadcast %19 : vector<1x256xf32> to vector<4x256xf32>
    %36 = arith.mulf %34, %35 : vector<4x256xf32>
    %c0_13 = arith.constant 0 : index
    %c0_14 = arith.constant 0 : index
    %37 = vector.load %arg5[%c0_13, %c0_14] : memref<1x256xf32, #tpu.memory_space<vmem>>, vector<1x256xf32>
    %38 = arith.mulf %28, %36 : vector<4x256xf32>
    %cst_15 = arith.constant dense<0.000000e+00> : vector<256xf32>
    %39 = vector.multi_reduction <add>, %38, %cst_15 [0] : vector<4x256xf32> to vector<256xf32>
    %40 = vector.shape_cast %39 : vector<256xf32> to vector<1x256xf32>
    %41 = arith.addf %37, %40 : vector<1x256xf32>
    %c0_16 = arith.constant 0 : index
    %c0_17 = arith.constant 0 : index
    %42 = vector.load %arg5[%c0_16, %c0_17] : memref<1x256xf32, #tpu.memory_space<vmem>>, vector<1x256xf32>
    tpu.vector_store %arg5[%c0_16, %c0_17], %41 {strides = array<i32>} : memref<1x256xf32, #tpu.memory_space<vmem>>, vector<1x256xf32>,
    %c0_18 = arith.constant 0 : index
    %c0_19 = arith.constant 0 : index
    %43 = vector.load %arg6[%c0_18, %c0_19] : memref<1x256xf32, #tpu.memory_space<vmem>>, vector<1x256xf32>
    %cst_20 = arith.constant dense<0.000000e+00> : vector<256xf32>
    %44 = vector.multi_reduction <add>, %28, %cst_20 [0] : vector<4x256xf32> to vector<256xf32>
    %45 = vector.shape_cast %44 : vector<256xf32> to vector<1x256xf32>
    %46 = arith.mulf %19, %45 : vector<1x256xf32>
    %47 = arith.addf %43, %46 : vector<1x256xf32>
    %c0_21 = arith.constant 0 : index
    %c0_22 = arith.constant 0 : index
    %48 = vector.load %arg6[%c0_21, %c0_22] : memref<1x256xf32, #tpu.memory_space<vmem>>, vector<1x256xf32>
    tpu.vector_store %arg6[%c0_21, %c0_22], %47 {strides = array<i32>} : memref<1x256xf32, #tpu.memory_space<vmem>>, vector<1x256xf32>,
    %c0_23 = arith.constant 0 : index
    %c0_24 = arith.constant 0 : index
    %49 = vector.load %arg7[%c0_23, %c0_24] : memref<1x256xf32, #tpu.memory_space<vmem>>, vector<1x256xf32>
    %50 = arith.addf %49, %19 : vector<1x256xf32>
    %c0_25 = arith.constant 0 : index
    %c0_26 = arith.constant 0 : index
    %51 = vector.load %arg7[%c0_25, %c0_26] : memref<1x256xf32, #tpu.memory_space<vmem>>, vector<1x256xf32>
    tpu.vector_store %arg7[%c0_25, %c0_26], %50 {strides = array<i32>} : memref<1x256xf32, #tpu.memory_space<vmem>>, vector<1x256xf32>,
    %c0_i32_27 = arith.constant 0 : i32
    %52 = arith.cmpi eq, %arg1, %c0_i32_27 : i32
    %53 = arith.extui %52 : i1 to i32
    %c0_i32_28 = arith.constant 0 : i32
    %54 = arith.cmpi ne, %53, %c0_i32_28 : i32
    scf.if %54 {
      %c0_29 = arith.constant 0 : index
      %c0_30 = arith.constant 0 : index
      %55 = vector.load %arg5[%c0_29, %c0_30] : memref<1x256xf32, #tpu.memory_space<vmem>>, vector<1x256xf32>
      %56 = vector.shape_cast %55 : vector<1x256xf32> to vector<1x1x256xf32>
      %cst_31 = arith.constant dense<0.000000e+00> : vector<1xf32>
      %57 = vector.multi_reduction <add>, %56, %cst_31 [1, 2] : vector<1x1x256xf32> to vector<1xf32>
      %58 = vector.shape_cast %57 : vector<1xf32> to vector<1x1x1xf32>
      %59 = vector.extract %58[0, 0, 0] : f32 from vector<1x1x1xf32>
      %c0_32 = arith.constant 0 : index
      %c0_33 = arith.constant 0 : index
      %60 = vector.load %arg6[%c0_32, %c0_33] : memref<1x256xf32, #tpu.memory_space<vmem>>, vector<1x256xf32>
      %61 = vector.shape_cast %60 : vector<1x256xf32> to vector<1x1x256xf32>
      %cst_34 = arith.constant dense<0.000000e+00> : vector<1xf32>
      %62 = vector.multi_reduction <add>, %61, %cst_34 [1, 2] : vector<1x1x256xf32> to vector<1xf32>
      %63 = vector.shape_cast %62 : vector<1xf32> to vector<1x1x1xf32>
      %64 = vector.extract %63[0, 0, 0] : f32 from vector<1x1x1xf32>
      %c0_35 = arith.constant 0 : index
      %c0_36 = arith.constant 0 : index
      %65 = vector.load %arg7[%c0_35, %c0_36] : memref<1x256xf32, #tpu.memory_space<vmem>>, vector<1x256xf32>
      %66 = vector.shape_cast %65 : vector<1x256xf32> to vector<1x1x256xf32>
      %cst_37 = arith.constant dense<0.000000e+00> : vector<1xf32>
      %67 = vector.multi_reduction <add>, %66, %cst_37 [1, 2] : vector<1x1x256xf32> to vector<1xf32>
      %68 = vector.shape_cast %67 : vector<1xf32> to vector<1x1x1xf32>
      %69 = vector.extract %68[0, 0, 0] : f32 from vector<1x1x1xf32>
      %70 = arith.addf %64, %69 : f32
      %cst_38 = arith.constant 9.99999974E-5 : f32
      %71 = arith.addf %70, %cst_38 : f32
      %cst_39 = arith.constant 2.000000e+00 : f32
      %72 = arith.mulf %cst_39, %59 : f32
      %cst_40 = arith.constant 9.99999974E-5 : f32
      %73 = arith.addf %72, %cst_40 : f32
      %74 = arith.divf %73, %71 : f32
      %cst_41 = arith.constant 1.000000e+00 : f32
      %75 = arith.subf %cst_41, %74 : f32
      %cst_42 = arith.constant 0.000000e+00 : f32
      %76 = arith.mulf %cst_42, %75 : f32
      %cst_43 = arith.constant 1.000000e+00 : f32
      %77 = arith.addf %cst_43, %76 : f32
      %78 = arith.divf %74, %77 : f32
      %cst_44 = arith.constant 1.000000e+00 : f32
      %79 = arith.subf %cst_44, %78 : f32
      %c0_45 = arith.constant 0 : index
      %80 = memref.load %arg4[%c0_45] : memref<1xf32, #tpu.memory_space<smem>>
      %81 = arith.addf %80, %79 : f32
      %c0_46 = arith.constant 0 : index
      %82 = memref.load %arg4[%c0_46] : memref<1xf32, #tpu.memory_space<smem>>
      memref.store %81, %arg4[%c0_46] : memref<1xf32, #tpu.memory_space<smem>>
      %c1_i32 = arith.constant 1 : i32
      %83 = arith.cmpi eq, %arg0, %c1_i32 : i32
      %84 = arith.extui %83 : i1 to i32
      %c0_i32_47 = arith.constant 0 : i32
      %85 = arith.cmpi ne, %84, %c0_i32_47 : i32
      scf.if %85 {
        %c0_48 = arith.constant 0 : index
        %86 = memref.load %arg4[%c0_48] : memref<1xf32, #tpu.memory_space<smem>>
        %cst_49 = arith.constant 2.000000e+00 : f32
        %87 = arith.divf %86, %cst_49 : f32
        %c0_50 = arith.constant 0 : index
        %88 = memref.load %arg4[%c0_50] : memref<1xf32, #tpu.memory_space<smem>>
        memref.store %87, %arg4[%c0_50] : memref<1xf32, #tpu.memory_space<smem>>
      } else {
      }
    } else {
    }
    return
  }
  func.func @transform_0(%arg0: i32, %arg1: i32) -> (i32, i32, i32) {
    %c0_i32 = arith.constant 0 : i32
    %c0_i32_0 = arith.constant 0 : i32
    return %arg0, %c0_i32, %arg1 : i32, i32, i32
  }
  func.func @transform_1(%arg0: i32, %arg1: i32) -> (i32, i32, i32) {
    %c0_i32 = arith.constant 0 : i32
    %c0_i32_0 = arith.constant 0 : i32
    return %arg0, %c0_i32, %arg1 : i32, i32, i32
  }
  func.func @transform_2(%arg0: i32, %arg1: i32) -> i32 {
    %c0_i32 = arith.constant 0 : i32
    %c0_i32_0 = arith.constant 0 : i32
    return %c0_i32 : i32
  }
}

</mosaic_0001>

<llo_original>
// kernel: tpu_custom_call.1
$region0: #{tpu_custom_call.1}
  #allocation0 [shape = 'u32[]', space=smem, size = 0x4, offset = 0x4, fixed_abs, tag = 'smem constant byte address 0x4 - core index']
  #allocation1 [shape = 'u32[144,128]{1,0:T(1,128)}', space=vmem, size = 0x12000, scoped, tag = 'internal scratch']
  #allocation2 [shape = 'f32[1,256]{1,0:T(1,128)}', space=vmem, size = 0x400, scoped, tag = 'scratch operand']
  #allocation3 [shape = 'f32[1,256]{1,0:T(1,128)}', space=vmem, size = 0x400, scoped, tag = 'scratch operand']
  #allocation4 [shape = 'f32[1,256]{1,0:T(1,128)}', space=vmem, size = 0x400, scoped, tag = 'scratch operand']
  %s0 = inlined_call_operand.hbm [shape: f32[2,4,256], index: 0, kind: input, shape index: {}]
  %s1 = inlined_call_operand.hbm [shape: s32[2,1,256], index: 1, kind: input, shape index: {}]
  %s2 = inlined_call_operand.hbm [shape: f32[1], index: 2, kind: output, shape index: {}]
  %s3 = sld [smem:[#allocation0]]
  $region65: #{tpu_custom_call.1} parent=0
    _
  %s5 = ssub.s32 1, %s3
  %s6 = scalar_select 0, %s5, %s3
  $region1: #{tpu_custom_call.1} parent=0
    #allocation5 [shape = 'u8[8192]{0}', space=vmem, size = 0x2000, scoped, tag = 'input window, operand 0']
    #allocation6 [shape = 's32[2]{0}', space=sflag, size = 0x8, scoped, tag = 'scoped memory for tpu_custom_call.1']
    #allocation7 [shape = 's32[2]{0}', space=sflag, size = 0x8, scoped, tag = 'scoped memory for tpu_custom_call.1']
    #allocation8 [shape = 'u8[2048]{0}', space=vmem, size = 0x800, scoped, tag = 'input window, operand 1']
    #allocation9 [shape = 's32[2]{0}', space=sflag, size = 0x8, scoped, tag = 'scoped memory for tpu_custom_call.1']
    #allocation10 [shape = 'u8[512]{0}', space=smem, size = 0x200, scoped, tag = 'output window, operand 0, single buffered']
    %7 = vsyncpa [#allocation6], 0
    %s8 = scalar_lea.sflag [#allocation6], 1
    %9 = vsyncpa %s8, 0
    %10 = vsyncpa [#allocation9], 0
    %s11 = scalar_lea.sflag [#allocation9], 1
    %12 = vsyncpa %s11, 0
    %13 = vsyncpa [#allocation7], 0
    loop: start=0, step=1, limit=4
    $region2: #{tpu_custom_call.1} parent=1 // loop_pre_header
      _
    $region3: #{tpu_custom_call.1} parent=1 // loop_header
      %s15 = sphi 0, %s19
      %p16 = scmp.ge.s32.totalorder %s15, 4
      %s22 = sphi 0, %s34
      %s23 = sphi 0, %s30
      %s24 = sphi 0, %s22
      %s25 = sphi 0, %s23
      %s26 = sphi 0, %s24
      %s27 = sphi 0, %s25
      %s39 = sphi 0, %s41
      %s42 = sphi 0, %s39
      %s43 = sphi 0, %s42
      %s59 = sphi 0, %s43
      %s67 = sphi 0, %s69
      %s70 = sphi 0, %s67
      %s71 = sphi 0, %s70
      %s87 = sphi 0, %s71
      %s91 = sphi 0, %s91
      %s93 = sphi 0, %s91
      %s94 = sphi 0, %s93
      %s108 = sphi 0, %s94
    $region4: #{tpu_custom_call.1} parent=1 // loop_header_branch
      %18 = sbr.rel (%p16) target = $region8
    $region5: #{tpu_custom_call.1} parent=1 // loop_body
      %s20 = ssub.s32 %s15, 1
      %s21 = ssub.s32 %s15, 2
      %s28 = sadd.s32 1, %s23
      %p29 = scmp.ge.s32.totalorder %s28, 1
      %s30 = scalar_select %p29, 0, %s28
      %s31 = sadd.s32 1, %s22
      %s32 = scalar_select %p29, %s31, %s22
      %p33 = scmp.ge.s32.totalorder %s32, 2
      %s34 = scalar_select %p33, 0, %s32
      %s35 = ssub.s32 %s22, %s34
      %s36 = ssub.s32 %s23, %s30
      %s37 = sor.u32 %s35, %s36
      %p38 = scmp.eq.s32.totalorder %s37, 0
      %s40 = sadd.s32 %s39, 1
      %s41 = scalar_select %p38, %s39, %s40
      %p44 = pneg %p38
      %p45 = scmp.eq.s32.totalorder %s15, 1
      %p46 = por %p44, %p45
      %p47 = scmp.ne.s32.totalorder %s39, %s42
      %p48 = scmp.eq.s32.totalorder %s15, 0
      %p49 = por %p47, %p48
      %p50 = scmp.ne.s32.totalorder %s39, %s42
      %p51 = scmp.eq.s32.totalorder %s20, 1
      %p52 = por %p50, %p51
      %p53 = scmp.ne.s32.totalorder %s42, %s43
      %p54 = scmp.eq.s32.totalorder %s20, 0
      %p55 = por %p53, %p54
      %p56 = scmp.ne.s32.totalorder %s42, %s43
      %p57 = scmp.eq.s32.totalorder %s21, 1
      %p58 = por %p56, %p57
      %p60 = scmp.ne.s32.totalorder %s43, %s59
      %p61 = scmp.eq.s32.totalorder %s21, 0
      %p62 = por %p60, %p61
      %s63 = ssub.s32 %s22, %s34
      %s64 = ssub.s32 %s23, %s30
      %s65 = sor.u32 %s63, %s64
      %p66 = scmp.eq.s32.totalorder %s65, 0
      %s68 = sadd.s32 %s67, 1
      %s69 = scalar_select %p66, %s67, %s68
      %p72 = pneg %p66
      %p73 = scmp.eq.s32.totalorder %s15, 1
      %p74 = por %p72, %p73
      %p75 = scmp.ne.s32.totalorder %s67, %s70
      %p76 = scmp.eq.s32.totalorder %s15, 0
      %p77 = por %p75, %p76
      %p78 = scmp.ne.s32.totalorder %s67, %s70
      %p79 = scmp.eq.s32.totalorder %s20, 1
      %p80 = por %p78, %p79
      %p81 = scmp.ne.s32.totalorder %s70, %s71
      %p82 = scmp.eq.s32.totalorder %s20, 0
      %p83 = por %p81, %p82
      %p84 = scmp.ne.s32.totalorder %s70, %s71
      %p85 = scmp.eq.s32.totalorder %s21, 1
      %p86 = por %p84, %p85
      %p88 = scmp.ne.s32.totalorder %s71, %s87
      %p89 = scmp.eq.s32.totalorder %s21, 0
      %p90 = por %p88, %p89
      %s92 = sadd.s32 %s91, 1
      %p95 = scmp.eq.s32.totalorder %s15, 1
      %p96 = scmp.ne.s32.totalorder %s91, %s93
      %p97 = scmp.eq.s32.totalorder %s15, 0
      %p98 = por %p96, %p97
      %p99 = scmp.ne.s32.totalorder %s91, %s93
      %p100 = scmp.eq.s32.totalorder %s20, 1
      %p101 = por %p99, %p100
      %p102 = scmp.ne.s32.totalorder %s93, %s94
      %p103 = scmp.eq.s32.totalorder %s20, 0
      %p104 = por %p102, %p103
      %p105 = scmp.ne.s32.totalorder %s93, %s94
      %p106 = scmp.eq.s32.totalorder %s21, 1
      %p107 = por %p105, %p106
      %p109 = scmp.ne.s32.totalorder %s94, %s108
      %p110 = scmp.eq.s32.totalorder %s21, 0
      %p111 = por %p109, %p110
      %p112 = scmp.le.s32.totalorder 1, %s15
      %p113 = scmp.lt.s32.totalorder %s15, 3
      %p114 = pnand %p112, %p113
      %p115 = pneg %p114
      // Predicated region
      $region9: #{tpu_custom_call.1} parent=5 // pred_check
        _
      $region10: #{tpu_custom_call.1} parent=5 // pred_check_branch
        %117 = sbr.rel (%p114) target = $region12
      $region11: #{tpu_custom_call.1} parent=5 // pred_region
        %s118 = ssub.s32 %s15, 1
      $region12: #{tpu_custom_call.1} parent=5 // pred_fallthru
        _
      %p119 = scmp.lt.s32.totalorder %s15, 2
      // Predicated region
      $region13: #{tpu_custom_call.1} parent=5 // pred_check
        %p120 = pneg %p119
      $region14: #{tpu_custom_call.1} parent=5 // pred_check_branch
        %122 = sbr.rel (%p120) target = $region16
      $region15: #{tpu_custom_call.1} parent=5 // pred_region
        // Predicated region
        $region17: #{tpu_custom_call.1} parent=15 // pred_check
          %p123 = pneg %p49
        $region18: #{tpu_custom_call.1} parent=15 // pred_check_branch
          %125 = sbr.rel (%p123) target = $region20
        $region19: #{tpu_custom_call.1} parent=15 // pred_region
          %s126 = sand.u32 %s39, 1
          %s127 = scalar_lea.sflag [#allocation6], %s126
          %s128 = sand.u32 %s39, 1
          %s129 = smul.addr %s128, 8
          %s130 = scalar_lea.vmem [#allocation5], %s129
          %s131 = smul.u32 2, %s23
          %s133 = ssub.s32 128, 128
          %134 = vsyncadd %s127, %s133
          %s135 = smul.addr %s22, 2
          %s136 = sadd.s32 %s131, %s135
          %s137 = smul.addr %s136, 64
          %s138 = scalar_lea.hbm %s0, %s137
          %s140 = sshll.u32 %s130, 4
          %s141 = int_to_ptr.vmem [resolvable:$true] %s140
          %143 = dma.hbm_to_vmem [thread:$0]  %s138, 128, %s141, %s127
        $region20: #{tpu_custom_call.1} parent=15 // pred_fallthru
          _
        // Predicated region
        $region21: #{tpu_custom_call.1} parent=15 // pred_check
          %p144 = pneg %p77
        $region22: #{tpu_custom_call.1} parent=15 // pred_check_branch
          %146 = sbr.rel (%p144) target = $region24
        $region23: #{tpu_custom_call.1} parent=15 // pred_region
          %s147 = sand.u32 %s67, 1
          %s148 = scalar_lea.sflag [#allocation9], %s147
          %s149 = sand.u32 %s67, 1
          %s150 = smul.addr %s149, 2
          %s151 = scalar_lea.vmem [#allocation8], %s150
          %s152 = smul.u32 2, %s23
          %s154 = ssub.s32 32, 32
          %155 = vsyncadd %s148, %s154
          %s156 = smul.addr %s22, 2
          %s157 = sadd.s32 %s152, %s156
          %s158 = smul.addr %s157, 16
          %s159 = scalar_lea.hbm %s1, %s158
          %s161 = sshll.u32 %s151, 4
          %s162 = int_to_ptr.vmem [resolvable:$true] %s161
          %164 = dma.hbm_to_vmem [thread:$0]  %s159, 32, %s162, %s148
        $region24: #{tpu_custom_call.1} parent=15 // pred_fallthru
          _
      $region16: #{tpu_custom_call.1} parent=5 // pred_fallthru
        _
      %p165 = scmp.le.s32.totalorder 1, %s15
      %p166 = scmp.lt.s32.totalorder %s15, 3
      %p167 = pnand %p165, %p166
      %p168 = pneg %p167
      // Predicated region
      $region25: #{tpu_custom_call.1} parent=5 // pred_check
        _
      $region26: #{tpu_custom_call.1} parent=5 // pred_check_branch
        %170 = sbr.rel (%p167) target = $region28
      $region27: #{tpu_custom_call.1} parent=5 // pred_region
        %s171 = ssub.s32 %s15, 1
        %s172 = sand.u32 %s42, 1
        %s173 = scalar_lea.sflag [#allocation6], %s172
        %s174 = sand.u32 %s42, 1
        %s175 = smul.addr %s174, 8
        %s176 = scalar_lea.vmem [#allocation5], %s175
        // Predicated region
        $region29: #{tpu_custom_call.1} parent=27 // pred_check
          %p177 = pneg %p55
        $region30: #{tpu_custom_call.1} parent=27 // pred_check_branch
          %179 = sbr.rel (%p177) target = $region32
        $region31: #{tpu_custom_call.1} parent=27 // pred_region
          %180 = dma.done %s173, 128
        $region32: #{tpu_custom_call.1} parent=27 // pred_fallthru
          _
        %s181 = sand.u32 %s70, 1
        %s182 = scalar_lea.sflag [#allocation9], %s181
        %s183 = sand.u32 %s70, 1
        %s184 = smul.addr %s183, 2
        %s185 = scalar_lea.vmem [#allocation8], %s184
        // Predicated region
        $region33: #{tpu_custom_call.1} parent=27 // pred_check
          %p186 = pneg %p83
        $region34: #{tpu_custom_call.1} parent=27 // pred_check_branch
          %188 = sbr.rel (%p186) target = $region36
        $region35: #{tpu_custom_call.1} parent=27 // pred_region
          %189 = dma.done %s182, 32
        $region36: #{tpu_custom_call.1} parent=27 // pred_fallthru
          _
        %s190 = sand.u32 %s42, 1
        %s191 = scalar_lea.sflag [#allocation6], %s190
        %s192 = sand.u32 %s42, 1
        %s193 = smul.addr %s192, 8
        %s194 = scalar_lea.vmem [#allocation5], %s193
        %p195 = pneg %p55
        %p196 = pneg %p52
        %s197 = sand.u32 %s70, 1
        %s198 = scalar_lea.sflag [#allocation9], %s197
        %s199 = sand.u32 %s70, 1
        %s200 = smul.addr %s199, 2
        %s201 = scalar_lea.vmem [#allocation8], %s200
        %p202 = pneg %p83
        %p203 = pneg %p80
        %p204 = pneg %p104
        %p205 = pneg %p101
        %s206 = smul.u32 2, %s25
        %s207 = smul.u32 2, %s25
        %p208 = scmp.eq.s32.totalorder %s24, 0
        %p209 = scmp.eq.s32.totalorder %s25, 0
        %p210 = pnand %p208, %p209
        %p211 = pneg %p210
        // Predicated region
        $region37: #{tpu_custom_call.1} parent=27 // pred_check
          _
        $region38: #{tpu_custom_call.1} parent=27 // pred_check_branch
          %213 = sbr.rel (%p210) target = $region40
        $region39: #{tpu_custom_call.1} parent=27 // pred_region
          %s214 = scalar_lea.smem [#allocation10], 0
          %215 = sst [smem:[%s214]] 0.0
        $region40: #{tpu_custom_call.1} parent=27 // pred_fallthru
          _
        // Predicated region
        $region41: #{tpu_custom_call.1} parent=27 // pred_check
          %p216 = pneg %p209
        $region42: #{tpu_custom_call.1} parent=27 // pred_check_branch
          %218 = sbr.rel (%p216) target = $region44
        $region43: #{tpu_custom_call.1} parent=27 // pred_region
          %v219 = vlaneseq
          %vm220 = vcmp.ge.s32.totalorder %v219, 0
          %vm221 = vcmp.lt.s32.totalorder %v219, 256
          %vm222 = vmand %vm220, %vm221
          %223 = vst.msk [vmem:[#allocation2] sm:$0x3] %vm222, 0.0
          %224 = vst.msk [vmem:[#allocation3] sm:$0x3] %vm222, 0.0
          %225 = vst.msk [vmem:[#allocation4] sm:$0x3] %vm222, 0.0
        $region44: #{tpu_custom_call.1} parent=27 // pred_fallthru
          _
        %v226 = vld [vmem:[%s176] sm:$0xff]
        %v227 = vld [vmem:[%s185] sm:$0x3]
        %s228 = smul.u32 %s25, 256
        %v229 = vlaneseq
        %v230 = vand.u32 %v229, 127
        %v231 = vadd.s32 %v230, 128
        %v232 = vstv %s228
        %v233 = vadd.s32 %v232, %v230
        %v234 = vadd.s32 %v232, %v231
        %vm235 = vcmp.lt.s32.totalorder %v233, 256
        %vm236 = vcmp.lt.s32.totalorder %v234, 256
        %v237 = vsel %vm235, 1, 0
        %v238 = vsel %vm236, 1, 0
        %v239 = vcvt.s32.f32 %v237
        %v240 = vcvt.s32.f32 %v238
        %v242 = vcombine.high %v226, %v226
        %vm244 = vcmask 1043456
        %v245 = vsel %vm244, %v226, -inf
        %v246 = vrot.slane %v245, 4
        %v247 = vmax.f32 %v245, %v246
        %v248 = vrot.slane %v247, 2
        %v249 = vmax.f32 %v247, %v248
        %v250 = vrot.slane %v249, 1
        %v251 = vmax.f32 %v249, %v250
        %v252 = vsel %vm244, %v242, -inf
        %v253 = vrot.slane %v252, 4
        %v254 = vmax.f32 %v252, %v253
        %v255 = vrot.slane %v254, 2
        %v256 = vmax.f32 %v254, %v255
        %v257 = vrot.slane %v256, 1
        %v258 = vmax.f32 %v256, %v257
        %v261 = vcombine.low %v251, %v258
        %v263 = vsub.f32 %v226, %v261
        %v264 = vmul.f32 %v263, 1.442695
        %v265 = vpow.pop %v264
        %v267 = vcombine.high %v265, %v265
        %v269 = vsel %vm244, %v265, 0.0
        %v270 = vrot.slane %v269, 4
        %v271 = vadd.f32 %v269, %v270
        %v272 = vrot.slane %v271, 2
        %v273 = vadd.f32 %v271, %v272
        %v274 = vrot.slane %v273, 1
        %v275 = vadd.f32 %v273, %v274
        %v276 = vsel %vm244, %v267, 0.0
        %v277 = vrot.slane %v276, 4
        %v278 = vadd.f32 %v276, %v277
        %v279 = vrot.slane %v278, 2
        %v280 = vadd.f32 %v278, %v279
        %v281 = vrot.slane %v280, 1
        %v282 = vadd.f32 %v280, %v281
        %v285 = vcombine.low %v275, %v282
        %v287 = vrcp.pop %v285
        %v288 = vmul.f32 %v265, %v287
        %v289 = vlaneseq
        %v290 = vshrl.u32 %v289, 7
        %v291 = vlaneseq
        %v292 = vshrl.u32 %v291, 7
        %v293 = vsub.s32 0, %v292
        %v294 = vrot.slane %v227, %v293
        %v295 = vlaneseq
        %v296 = vshrl.u32 %v295, 7
        %v297 = vsub.s32 1, %v296
        %v298 = vrot.slane %v227, %v297
        %vm299 = vcmp.eq.s32.totalorder %v290, %v294
        %vm300 = vcmp.eq.s32.totalorder %v290, %v298
        %v301 = vsel %vm299, 1.0, 0.0
        %v302 = vsel %vm300, 1.0, 0.0
        %v303 = vmul.f32 %v301, %v239
        %v304 = vmul.f32 %v302, %v240
        %v305 = vld [vmem:[#allocation2] sm:$0x3]
        %v308 = vcombine.low %v303, %v304
        %v310 = vmul.f32 %v288, %v308
        %v312 = vcombine.high %v310, %v310
        %v314 = vsel %vm244, %v310, 0.0
        %v315 = vrot.slane %v314, 4
        %v316 = vadd.f32 %v314, %v315
        %v317 = vrot.slane %v316, 2
        %v318 = vadd.f32 %v316, %v317
        %v319 = vrot.slane %v318, 1
        %v320 = vadd.f32 %v318, %v319
        %v321 = vsel %vm244, %v312, 0.0
        %v322 = vrot.slane %v321, 4
        %v323 = vadd.f32 %v321, %v322
        %v324 = vrot.slane %v323, 2
        %v325 = vadd.f32 %v323, %v324
        %v326 = vrot.slane %v325, 1
        %v327 = vadd.f32 %v325, %v326
        %v330 = vcombine.low %v320, %v327
        %v332 = vunpack.c.l.s4 1966171168
        %v333 = vunpack.c.0.s8 %v332
        %v334 = vlaneseq
        %v335 = vshrl.u32 %v334, 7
        %v336 = vsub.s32 %v333, %v335
        %v337 = vrot.slane %v330, %v336
        %v339 = vunpack.c.l.s4 1966171168
        %v340 = vunpack.c.0.s8 %v339
        %v341 = vlaneseq
        %v342 = vshrl.u32 %v341, 7
        %v343 = vsub.s32 %v340, %v342
        %v344 = vrot.slane %v337, %v343
        %v346 = vadd.f32 %v305, %v344
        %v347 = vlaneseq
        %vm348 = vcmp.ge.s32.totalorder %v347, 0
        %vm349 = vcmp.lt.s32.totalorder %v347, 256
        %vm350 = vmand %vm348, %vm349
        %351 = vst.msk [vmem:[#allocation2] sm:$0x3] %vm350, %v346
        %v352 = vld [vmem:[#allocation3] sm:$0x3]
        %v354 = vcombine.high %v288, %v288
        %v356 = vsel %vm244, %v288, 0.0
        %v357 = vrot.slane %v356, 4
        %v358 = vadd.f32 %v356, %v357
        %v359 = vrot.slane %v358, 2
        %v360 = vadd.f32 %v358, %v359
        %v361 = vrot.slane %v360, 1
        %v362 = vadd.f32 %v360, %v361
        %v363 = vsel %vm244, %v354, 0.0
        %v364 = vrot.slane %v363, 4
        %v365 = vadd.f32 %v363, %v364
        %v366 = vrot.slane %v365, 2
        %v367 = vadd.f32 %v365, %v366
        %v368 = vrot.slane %v367, 1
        %v369 = vadd.f32 %v367, %v368
        %v370 = vmul.f32 %v239, %v362
        %v371 = vmul.f32 %v240, %v369
        %v374 = vcombine.low %v370, %v371
        %v376 = vunpack.c.l.s4 1966171168
        %v377 = vunpack.c.0.s8 %v376
        %v378 = vlaneseq
        %v379 = vshrl.u32 %v378, 7
        %v380 = vsub.s32 %v377, %v379
        %v381 = vrot.slane %v374, %v380
        %v383 = vunpack.c.l.s4 1966171168
        %v384 = vunpack.c.0.s8 %v383
        %v385 = vlaneseq
        %v386 = vshrl.u32 %v385, 7
        %v387 = vsub.s32 %v384, %v386
        %v388 = vrot.slane %v381, %v387
        %v390 = vadd.f32 %v352, %v388
        %391 = vst.msk [vmem:[#allocation3] sm:$0x3] %vm350, %v390
        %v392 = vld [vmem:[#allocation4] sm:$0x3]
        %v395 = vcombine.low %v239, %v240
        %v397 = vunpack.c.l.s4 1966171168
        %v398 = vunpack.c.0.s8 %v397
        %v399 = vlaneseq
        %v400 = vshrl.u32 %v399, 7
        %v401 = vsub.s32 %v398, %v400
        %v402 = vrot.slane %v395, %v401
        %v404 = vunpack.c.l.s4 1966171168
        %v405 = vunpack.c.0.s8 %v404
        %v406 = vlaneseq
        %v407 = vshrl.u32 %v406, 7
        %v408 = vsub.s32 %v405, %v407
        %v409 = vrot.slane %v402, %v408
        %v411 = vadd.f32 %v392, %v409
        %412 = vst.msk [vmem:[#allocation4] sm:$0x3] %vm350, %v411
        // Predicated region
        $region45: #{tpu_custom_call.1} parent=27 // pred_check
          %p413 = pneg %p209
        $region46: #{tpu_custom_call.1} parent=27 // pred_check_branch
          %415 = sbr.rel (%p413) target = $region48
        $region47: #{tpu_custom_call.1} parent=27 // pred_region
          %v416 = vld [vmem:[#allocation2] sm:$0x3]
          %v418 = vlaneseq
          %v419 = vshrl.u32 %v418, 7
          %v420 = vsub.s32 0, %v419
          %v421 = vrot.slane %v416, %v420
          %v422 = vlaneseq
          %v423 = vshrl.u32 %v422, 7
          %v424 = vsub.s32 1, %v423
          %v425 = vrot.slane %v416, %v424
          %vm428 = vcmask 1040384
          %v429 = vsel %vm428, %v421, 0.0
          %v430 = vsel %vm428, %v425, 0.0
          %v431 = vadd.f32 %v429, %v430
          %432 = vadd.xlane.f32.xlu0 %v431
          %v433 = vpop.xlane.xlu0 %432
          %v434 = vrot.slane %v433, 4
          %v435 = vadd.f32 %v433, %v434
          %v436 = vrot.slane %v435, 2
          %v437 = vadd.f32 %v435, %v436
          %v438 = vrot.slane %v437, 1
          %v439 = vadd.f32 %v437, %v438
          %s440 = vtos %v439
          %v441 = vld [vmem:[#allocation3] sm:$0x3]
          %v443 = vlaneseq
          %v444 = vshrl.u32 %v443, 7
          %v445 = vsub.s32 0, %v444
          %v446 = vrot.slane %v441, %v445
          %v447 = vlaneseq
          %v448 = vshrl.u32 %v447, 7
          %v449 = vsub.s32 1, %v448
          %v450 = vrot.slane %v441, %v449
          %v453 = vsel %vm428, %v446, 0.0
          %v454 = vsel %vm428, %v450, 0.0
          %v455 = vadd.f32 %v453, %v454
          %456 = vadd.xlane.f32.xlu0 %v455
          %v457 = vpop.xlane.xlu0 %456
          %v458 = vrot.slane %v457, 4
          %v459 = vadd.f32 %v457, %v458
          %v460 = vrot.slane %v459, 2
          %v461 = vadd.f32 %v459, %v460
          %v462 = vrot.slane %v461, 1
          %v463 = vadd.f32 %v461, %v462
          %s464 = vtos %v463
          %v465 = vld [vmem:[#allocation4] sm:$0x3]
          %v467 = vlaneseq
          %v468 = vshrl.u32 %v467, 7
          %v469 = vsub.s32 0, %v468
          %v470 = vrot.slane %v465, %v469
          %v471 = vlaneseq
          %v472 = vshrl.u32 %v471, 7
          %v473 = vsub.s32 1, %v472
          %v474 = vrot.slane %v465, %v473
          %v477 = vsel %vm428, %v470, 0.0
          %v478 = vsel %vm428, %v474, 0.0
          %v479 = vadd.f32 %v477, %v478
          %480 = vadd.xlane.f32.xlu0 %v479
          %v481 = vpop.xlane.xlu0 %480
          %v482 = vrot.slane %v481, 4
          %v483 = vadd.f32 %v481, %v482
          %v484 = vrot.slane %v483, 2
          %v485 = vadd.f32 %v483, %v484
          %v486 = vrot.slane %v485, 1
          %v487 = vadd.f32 %v485, %v486
          %s488 = vtos %v487
          %s489 = sadd.f32 %s464, %s488
          %s490 = sadd.f32 %s489, 0.0001
          %s491 = smul.f32 %s440, 2.0
          %s492 = sadd.f32 %s491, 0.0001
          %v493 = vstv %s490
          %v494 = vrcp.pop %v493
          %s495 = vtos %v494
          %s496 = smul.f32 %s492, %s495
          %s497 = ssub.f32 1.0, %s496
          %s498 = smul.f32 %s497, 0.0
          %s499 = sadd.f32 %s498, 1.0
          %v500 = vstv %s499
          %v501 = vrcp.pop %v500
          %s502 = vtos %v501
          %s503 = smul.f32 %s496, %s502
          %s504 = ssub.f32 1.0, %s503
          %s505 = sld [smem:[#allocation10]]
          %s506 = sadd.f32 %s505, %s504
          %s507 = scalar_lea.smem [#allocation10], 0
          %508 = sst [smem:[%s507]] %s506
          %p509 = scmp.eq.s32.totalorder %s24, 1
          // Predicated region
          $region49: #{tpu_custom_call.1} parent=47 // pred_check
            %p510 = pneg %p509
          $region50: #{tpu_custom_call.1} parent=47 // pred_check_branch
            %512 = sbr.rel (%p510) target = $region52
          $region51: #{tpu_custom_call.1} parent=47 // pred_region
            %s513 = sld [smem:[#allocation10]]
            %v514 = vrcp.pop 2.0
            %s515 = vtos %v514
            %s516 = smul.f32 %s513, %s515
            %517 = sst [smem:[%s507]] %s516
          $region52: #{tpu_custom_call.1} parent=47 // pred_fallthru
            _
        $region48: #{tpu_custom_call.1} parent=27 // pred_fallthru
          _
        // Predicated region
        $region53: #{tpu_custom_call.1} parent=27 // pred_check
          %p518 = pneg %p101
        $region54: #{tpu_custom_call.1} parent=27 // pred_check_branch
          %520 = sbr.rel (%p518) target = $region56
        $region55: #{tpu_custom_call.1} parent=27 // pred_region
          %s522 = ssub.s32 16, 16
          %523 = vsyncadd [#allocation7], %s522
          %526 = dma.smem_to_hbm [#allocation10], 16, %s2, [#allocation7]
        $region56: #{tpu_custom_call.1} parent=27 // pred_fallthru
          _
        // Predicated region
        $region57: #{tpu_custom_call.1} parent=27 // pred_check
          %p527 = pneg %p101
        $region58: #{tpu_custom_call.1} parent=27 // pred_check_branch
          %529 = sbr.rel (%p527) target = $region60
        $region59: #{tpu_custom_call.1} parent=27 // pred_region
          %530 = dma.done [#allocation7], 16
        $region60: #{tpu_custom_call.1} parent=27 // pred_fallthru
          _
        %531 = sfence
      $region28: #{tpu_custom_call.1} parent=5 // pred_fallthru
        _
      %p532 = scmp.le.s32.totalorder 2, %s15
      // Predicated region
      $region61: #{tpu_custom_call.1} parent=5 // pred_check
        %p533 = pneg %p532
      $region62: #{tpu_custom_call.1} parent=5 // pred_check_branch
        %535 = sbr.rel (%p533) target = $region64
      $region63: #{tpu_custom_call.1} parent=5 // pred_region
        %s536 = ssub.s32 %s15, 2
      $region64: #{tpu_custom_call.1} parent=5 // pred_fallthru
        _
    $region6: #{tpu_custom_call.1} parent=1 // loop_footer
      %s19 = sadd.s32 1, %s15
    $region7: #{tpu_custom_call.1} parent=1 // loop_footer_branch
      %14 = sbr.rel target = $region3
    $region8: #{tpu_custom_call.1} parent=1 // loop_exit
      _
    %537 = vsyncpa [#allocation6], 1
    %s538 = scalar_lea.sflag [#allocation6], 1
    %539 = vsyncpa %s538, 1
    %540 = vsyncpa [#allocation9], 1
    %s541 = scalar_lea.sflag [#allocation9], 1
    %542 = vsyncpa %s541, 1
    %543 = vsyncpa [#allocation7], 1
    %s544 = scalar_lea.sflag [#allocation7], 1
    %545 = vsyncpa %s544, 1

</llo_original>
